<compile_context>
chip_gen: v5e
topology: v5e:2x2
jax: 0.10.0
libtpu: 0.0.40
codegen_flags: <defaults>
</compile_context>

<pallas_src>
import functools

import jax
import jax.numpy as jnp
from jax.experimental import pallas as pl
from jax.experimental.pallas import tpu as pltpu

LN_EPS = 1e-5
_INV_SQRT2 = 0.7071067811865476


def _round_up(v, m):
    return ((v + m - 1) // m) * m


def _cdiv(a, b):
    return (a + b - 1) // b


def _resblock_kernel(x_ref, w_ref, b_ref, g_ref, beta_ref, o_ref, *,
                     actual_size, compute_dtype, approximate_gelu):
    x = x_ref[...]                                   # (tm, S_pad), io dtype
    xf = x.astype(jnp.float32)                       # residual path in f32

    # Linear: y = x @ W^T + b (W passed pre-transposed + zero-padded).
    h = jnp.dot(x.astype(compute_dtype), w_ref[...],
                preferred_element_type=jnp.float32)
    h = h + b_ref[...]                               # bias padded with zeros

    if approximate_gelu:
        h = jax.nn.gelu(h, approximate=True)         # EUP-routed tanh variant
    else:
        # Exact (erf-based) GELU, matching nn.GELU() default.
        h = 0.5 * h * (1.0 + jax.lax.erf(h * jnp.float32(_INV_SQRT2)))

    # LayerNorm over the *actual* feature width.  Padded lanes are zeroed via
    # the lane mask; stats are fused into a single pass (E[h], E[h^2]).
    s_pad = h.shape[-1]
    if actual_size != s_pad:
        lane = jax.lax.broadcasted_iota(jnp.int32, (1, s_pad), 1)
        h = jnp.where(lane < actual_size, h, 0.0)
    inv_n = jnp.float32(1.0 / actual_size)
    mean = jnp.sum(h, axis=-1, keepdims=True) * inv_n
    ex2 = jnp.sum(h * h, axis=-1, keepdims=True) * inv_n
    var = jnp.maximum(ex2 - mean * mean, 0.0)
    hn = (h - mean) * jax.lax.rsqrt(var + jnp.float32(LN_EPS))
    # gamma/beta padded with zeros -> padded lanes land at exactly 0.
    hn = hn * g_ref[...] + beta_ref[...]

    # Dropout(p=0.1) -> identity in eval mode.  Residual add in f32.
    o_ref[...] = (xf + hn).astype(o_ref.dtype)


def make_residual_block(w, b, gamma, beta, *, tm=512,
                        compute_dtype=jnp.bfloat16,
                        io_dtype=jnp.float32,
                        approximate_gelu=False):
    """Build a jitted ResidualBlock forward.  Weight preprocessing (transpose,
    pad, cast) is done once here, outside the per-call jitted path."""
    w = jnp.asarray(w, jnp.float32)
    size = w.shape[0]
    size_p = max(128, _round_up(size, 128))
    pad_f = size_p - size

    # One-time parameter preprocessing.
    w_t = jnp.pad(w.T, ((0, pad_f), (0, pad_f))).astype(compute_dtype)
    b_p = jnp.pad(jnp.asarray(b, jnp.float32), (0, pad_f)).reshape(1, size_p)
    g_p = jnp.pad(jnp.asarray(gamma, jnp.float32), (0, pad_f)).reshape(1, size_p)
    be_p = jnp.pad(jnp.asarray(beta, jnp.float32), (0, pad_f)).reshape(1, size_p)

    # Per-TensorCore VMEM capacity (v5e/v6e: 128 MiB, v7x: 64 MiB); keep ~85%.
    try:
        vmem_cap = int(pltpu.get_tpu_info().vmem_capacity_bytes)
    except Exception:  # conservative fallback valid on every generation
        vmem_cap = 64 << 20
    vmem_budget = int(vmem_cap * 0.85)

    w_item = jnp.dtype(compute_dtype).itemsize
    io_item = jnp.dtype(io_dtype).itemsize
    # Grid-invariant operands are single-buffered (pl.Buffered(1)).
    fixed_bytes = size_p * size_p * w_item + 3 * size_p * 4
    # Per-row bytes: double-buffered x + out tiles, plus ~4 live f32
    # elementwise temporaries (h, mask/where, hn, broadcasts) in the kernel.
    per_row = size_p * (2 * io_item + 2 * io_item + 4 * 4)
    tm_cap = max(8, (vmem_budget - fixed_bytes - (2 << 20)) // per_row)

    kernel = functools.partial(_resblock_kernel, actual_size=size,
                               compute_dtype=compute_dtype,
                               approximate_gelu=approximate_gelu)

    @jax.jit
    def apply(x):
        orig_shape = x.shape
        assert orig_shape[-1] == size, "feature dim mismatch"
        x2 = x.reshape(-1, size).astype(io_dtype)
        rows = x2.shape[0]
        # Only the feature dim is padded (lane density / zero padded-K).
        # Rows stay ragged: grid = ceil(rows / tm), no extra HBM pass over x.
        x_p = jnp.pad(x2, ((0, 0), (0, pad_f))) if pad_f else x2

        tm_eff = min(tm, tm_cap, _round_up(rows, 8))
        if tm_eff >= 256:
            tm_eff = (tm_eff // 256) * 256   # full MXU M-cadence on v6e/v7x
        else:
            tm_eff = max(8, (tm_eff // 8) * 8)
        grid = _cdiv(rows, tm_eff)
        # Megacore: make sure both TensorCores (v7x) get at least one tile.
        if grid < 2 and rows > 8:
            tm_eff = _round_up(_cdiv(rows, 2), 8)
            grid = _cdiv(rows, tm_eff)

        vmem_bytes = int(min(max(fixed_bytes + per_row * tm_eff + (2 << 20),
                                 16 << 20),
                             vmem_budget))

        single = pl.Buffered(1)
        out = pl.pallas_call(
            kernel,
            out_shape=jax.ShapeDtypeStruct((rows, size_p), io_dtype),
            grid_spec=pltpu.PrefetchScalarGridSpec(
                num_scalar_prefetch=0,
                grid=(grid,),
                in_specs=[
                    pl.BlockSpec((tm_eff, size_p), lambda i: (i, 0)),  # x tile
                    pl.BlockSpec((size_p, size_p), lambda i: (0, 0),   # W^T
                                 pipeline_mode=single),
                    pl.BlockSpec((1, size_p), lambda i: (0, 0),        # bias
                                 pipeline_mode=single),
                    pl.BlockSpec((1, size_p), lambda i: (0, 0),        # gamma
                                 pipeline_mode=single),
                    pl.BlockSpec((1, size_p), lambda i: (0, 0),        # beta
                                 pipeline_mode=single),
                ],
                out_specs=pl.BlockSpec((tm_eff, size_p), lambda i: (i, 0)),
            ),
            compiler_params=pltpu.CompilerParams(
                dimension_semantics=("parallel",),
                vmem_limit_bytes=vmem_bytes),
        )(x_p, w_t, b_p, g_p, be_p)

        return out[:, :size].reshape(orig_shape)

    return apply


def residual_block(x, w, b, gamma, beta, **kwargs):
    """One-shot convenience wrapper (re-preprocesses weights every call)."""
    return make_residual_block(w, b, gamma, beta, **kwargs)(x)


def _reference(x, w, b, gamma, beta):
    h = x @ w.T + b
    h = jax.nn.gelu(h, approximate=False)
    mean = jnp.mean(h, axis=-1, keepdims=True)
    var = jnp.mean(jnp.square(h - mean), axis=-1, keepdims=True)
    hn = (h - mean) / jnp.sqrt(var + LN_EPS)
    hn = hn * gamma + beta
    return x + hn


if __name__ == "__main__":
    size = 32          # hidden size
    batch, seq = 2, 8  # -> 16 rows total

    key = jax.random.PRNGKey(0)
    kx, kw, kb = jax.random.split(key, 3)

    x = jax.random.normal(kx, (batch, seq, size), dtype=jnp.float32)
    # nn.Linear(size, size): weight (out, in), bias (out,)
    bound = 1.0 / (size ** 0.5)
    w = jax.random.uniform(kw, (size, size), jnp.float32, -bound, bound)
    b = jax.random.uniform(kb, (size,), jnp.float32, -bound, bound)
    # nn.LayerNorm(size) default init is ones/zeros.
    gamma = jnp.ones((size,), jnp.float32)
    beta = jnp.zeros((size,), jnp.float32)

    ref = _reference(x, w, b, gamma, beta)

    # Exact math check: f32 compute + f32 I/O.
    fn_f32 = make_residual_block(w, b, gamma, beta,
                                 compute_dtype=jnp.float32,
                                 io_dtype=jnp.float32)
    out_f32 = jax.block_until_ready(fn_f32(x))
    assert out_f32.shape == x.shape
    assert jnp.allclose(out_f32, ref, atol=2e-5, rtol=2e-5), "f32 mismatch vs reference"

    # Fast path: bf16 MXU matmul with f32 accumulation, f32 I/O.
    fn_bf16 = make_residual_block(w, b, gamma, beta)
    out_bf16 = jax.block_until_ready(fn_bf16(x))
    assert out_bf16.shape == x.shape
    assert jnp.allclose(out_bf16, ref, atol=3e-2, rtol=3e-2), "bf16 mismatch vs reference"

    # Lowest-bandwidth path: bf16 compute and bf16 I/O (halves HBM bytes).
    fn_io16 = make_residual_block(w, b, gamma, beta, io_dtype=jnp.bfloat16)
    out_io16 = jax.block_until_ready(fn_io16(x.astype(jnp.bfloat16)))
    assert out_io16.shape == x.shape
    assert out_io16.dtype == jnp.bfloat16
    assert jnp.allclose(out_io16.astype(jnp.float32), ref,
                        atol=7e-2, rtol=7e-2), "bf16-io mismatch vs reference"

    print("KERNEL_OK")
</pallas_src>

<mosaic_0001>
module attributes {stable_mosaic.version = 11 : i64} {
  func.func @_resblock_kernel(%arg0: i32, %arg1: memref<8x128xf32, #tpu.memory_space<vmem>>, %arg2: memref<128x128xf32, #tpu.memory_space<vmem>>, %arg3: memref<1x128xf32, #tpu.memory_space<vmem>>, %arg4: memref<1x128xf32, #tpu.memory_space<vmem>>, %arg5: memref<1x128xf32, #tpu.memory_space<vmem>>, %arg6: memref<8x128xf32, #tpu.memory_space<vmem>>) attributes {dimension_semantics = [#tpu.dimension_semantics<parallel>], iteration_bounds = array<i64: 2>, scalar_prefetch = 0 : i64, scratch_operands = 0 : i64, tpu.core_type = #tpu.core_type<tc>, window_params = [{transform_indices = @transform_0, window_bounds = array<i64: 8, 128>}, {pipeline_mode = #tpu.pipeline_mode<synchronous>, transform_indices = @transform_1, window_bounds = array<i64: 128, 128>}, {pipeline_mode = #tpu.pipeline_mode<synchronous>, transform_indices = @transform_2, window_bounds = array<i64: 1, 128>}, {pipeline_mode = #tpu.pipeline_mode<synchronous>, transform_indices = @transform_3, window_bounds = array<i64: 1, 128>}, {pipeline_mode = #tpu.pipeline_mode<synchronous>, transform_indices = @transform_4, window_bounds = array<i64: 1, 128>}, {transform_indices = @transform_5, window_bounds = array<i64: 8, 128>}]} {
    %c0 = arith.constant 0 : index
    %c0_0 = arith.constant 0 : index
    %0 = vector.load %arg1[%c0, %c0_0] : memref<8x128xf32, #tpu.memory_space<vmem>>, vector<8x128xf32>
    %c0_1 = arith.constant 0 : index
    %c0_2 = arith.constant 0 : index
    %1 = vector.load %arg2[%c0_1, %c0_2] : memref<128x128xf32, #tpu.memory_space<vmem>>, vector<128x128xf32>
    %cst = arith.constant dense<0.000000e+00> : vector<8x128xf32>
    %2 = tpu.matmul %0, %1, %cst {dimension_numbers = #tpu.dot_dimension_numbers<[1], [0], [0], [1], [0, 0, 1, 1], [], []>} : vector<8x128xf32>, vector<128x128xf32>, vector<8x128xf32> -> vector<8x128xf32>
    %c0_3 = arith.constant 0 : index
    %c0_4 = arith.constant 0 : index
    %3 = vector.load %arg3[%c0_3, %c0_4] : memref<1x128xf32, #tpu.memory_space<vmem>>, vector<1x128xf32>
    %4 = vector.broadcast %3 : vector<1x128xf32> to vector<8x128xf32>
    %5 = arith.addf %2, %4 : vector<8x128xf32>
    %cst_5 = arith.constant 5.000000e-01 : f32
    %6 = vector.broadcast %cst_5 : f32 to vector<8x128xf32>
    %7 = arith.mulf %6, %5 : vector<8x128xf32>
    %cst_6 = arith.constant 0.707106769 : f32
    %8 = vector.broadcast %cst_6 : f32 to vector<8x128xf32>
    %9 = arith.mulf %5, %8 : vector<8x128xf32>
    %10 = math.erf %9 : vector<8x128xf32>
    %cst_7 = arith.constant 1.000000e+00 : f32
    %11 = vector.broadcast %cst_7 : f32 to vector<8x128xf32>
    %12 = arith.addf %11, %10 : vector<8x128xf32>
    %13 = arith.mulf %7, %12 : vector<8x128xf32>
    %14 = tpu.iota {dimensions = array<i32: 1>} : vector<1x128xi32>
    %c32_i32 = arith.constant 32 : i32
    %15 = vector.broadcast %c32_i32 : i32 to vector<1x128xi32>
    %16 = arith.cmpi slt, %14, %15 : vector<1x128xi32>
    %cst_8 = arith.constant 0.000000e+00 : f32
    %17 = vector.shape_cast %16 : vector<1x128xi1> to vector<1x128xi1>
    %18 = vector.broadcast %17 : vector<1x128xi1> to vector<8x128xi1>
    %19 = vector.broadcast %cst_8 : f32 to vector<8x128xf32>
    %20 = arith.select %18, %13, %19 : vector<8x128xi1>, vector<8x128xf32>
    %cst_9 = arith.constant dense<0.000000e+00> : vector<8xf32>
    %21 = vector.multi_reduction <add>, %20, %cst_9 [1] : vector<8x128xf32> to vector<8xf32>
    %22 = vector.shape_cast %21 : vector<8xf32> to vector<8x1xf32>
    %cst_10 = arith.constant 3.125000e-02 : f32
    %23 = vector.broadcast %cst_10 : f32 to vector<8x1xf32>
    %24 = arith.mulf %22, %23 : vector<8x1xf32>
    %25 = arith.mulf %20, %20 : vector<8x128xf32>
    %cst_11 = arith.constant dense<0.000000e+00> : vector<8xf32>
    %26 = vector.multi_reduction <add>, %25, %cst_11 [1] : vector<8x128xf32> to vector<8xf32>
    %27 = vector.shape_cast %26 : vector<8xf32> to vector<8x1xf32>
    %cst_12 = arith.constant 3.125000e-02 : f32
    %28 = vector.broadcast %cst_12 : f32 to vector<8x1xf32>
    %29 = arith.mulf %27, %28 : vector<8x1xf32>
    %30 = arith.mulf %24, %24 : vector<8x1xf32>
    %31 = arith.subf %29, %30 : vector<8x1xf32>
    %cst_13 = arith.constant 0.000000e+00 : f32
    %32 = vector.broadcast %cst_13 : f32 to vector<8x1xf32>
    %33 = arith.maximumf %31, %32 : vector<8x1xf32>
    %34 = vector.broadcast %24 : vector<8x1xf32> to vector<8x128xf32>
    %35 = arith.subf %20, %34 : vector<8x128xf32>
    %cst_14 = arith.constant 9.99999974E-6 : f32
    %36 = vector.broadcast %cst_14 : f32 to vector<8x1xf32>
    %37 = arith.addf %33, %36 : vector<8x1xf32>
    %38 = math.rsqrt %37 : vector<8x1xf32>
    %39 = vector.broadcast %38 : vector<8x1xf32> to vector<8x128xf32>
    %40 = arith.mulf %35, %39 : vector<8x128xf32>
    %c0_15 = arith.constant 0 : index
    %c0_16 = arith.constant 0 : index
    %41 = vector.load %arg4[%c0_15, %c0_16] : memref<1x128xf32, #tpu.memory_space<vmem>>, vector<1x128xf32>
    %42 = vector.broadcast %41 : vector<1x128xf32> to vector<8x128xf32>
    %43 = arith.mulf %40, %42 : vector<8x128xf32>
    %c0_17 = arith.constant 0 : index
    %c0_18 = arith.constant 0 : index
    %44 = vector.load %arg5[%c0_17, %c0_18] : memref<1x128xf32, #tpu.memory_space<vmem>>, vector<1x128xf32>
    %45 = vector.broadcast %44 : vector<1x128xf32> to vector<8x128xf32>
    %46 = arith.addf %43, %45 : vector<8x128xf32>
    %47 = arith.addf %0, %46 : vector<8x128xf32>
    %c0_19 = arith.constant 0 : index
    %c0_20 = arith.constant 0 : index
    %48 = vector.load %arg6[%c0_19, %c0_20] : memref<8x128xf32, #tpu.memory_space<vmem>>, vector<8x128xf32>
    tpu.vector_store %arg6[%c0_19, %c0_20], %47 {strides = array<i32>} : memref<8x128xf32, #tpu.memory_space<vmem>>, vector<8x128xf32>,
    return
  }
  func.func @transform_0(%arg0: i32) -> (i32, i32) {
    %c0_i32 = arith.constant 0 : i32
    %c0_i32_0 = arith.constant 0 : i32
    return %arg0, %c0_i32 : i32, i32
  }
  func.func @transform_1(%arg0: i32) -> (i32, i32) {
    %c0_i32 = arith.constant 0 : i32
    %c0_i32_0 = arith.constant 0 : i32
    %c0_i32_1 = arith.constant 0 : i32
    return %c0_i32, %c0_i32_0 : i32, i32
  }
  func.func @transform_2(%arg0: i32) -> (i32, i32) {
    %c0_i32 = arith.constant 0 : i32
    %c0_i32_0 = arith.constant 0 : i32
    %c0_i32_1 = arith.constant 0 : i32
    return %c0_i32, %c0_i32_0 : i32, i32
  }
  func.func @transform_3(%arg0: i32) -> (i32, i32) {
    %c0_i32 = arith.constant 0 : i32
    %c0_i32_0 = arith.constant 0 : i32
    %c0_i32_1 = arith.constant 0 : i32
    return %c0_i32, %c0_i32_0 : i32, i32
  }
  func.func @transform_4(%arg0: i32) -> (i32, i32) {
    %c0_i32 = arith.constant 0 : i32
    %c0_i32_0 = arith.constant 0 : i32
    %c0_i32_1 = arith.constant 0 : i32
    return %c0_i32, %c0_i32_0 : i32, i32
  }
  func.func @transform_5(%arg0: i32) -> (i32, i32) {
    %c0_i32 = arith.constant 0 : i32
    %c0_i32_0 = arith.constant 0 : i32
    return %arg0, %c0_i32 : i32, i32
  }
}

</mosaic_0001>

<llo_original>
// kernel: apply.1
$region0: #{apply.1}
  #allocation0 [shape = 'u32[]', space=smem, size = 0x4, offset = 0x4, fixed_abs, tag = 'smem constant byte address 0x4 - core index']
  #allocation1 [shape = 'u32[72,128]{1,0:T(1,128)}', space=vmem, size = 0x9000, scoped, tag = 'internal scratch']
  %s0 = inlined_call_operand.vmem [shape: f32[16,128], index: 0, kind: input, shape index: {}]
  %s1 = inlined_call_operand.hbm [shape: f32[128,128], index: 1, kind: input, shape index: {}]
  %s2 = inlined_call_operand.vmem [shape: f32[1,128], index: 2, kind: input, shape index: {}]
  %s3 = inlined_call_operand.vmem [shape: f32[1,128], index: 3, kind: input, shape index: {}]
  %s4 = inlined_call_operand.vmem [shape: f32[1,128], index: 4, kind: input, shape index: {}]
  %s5 = inlined_call_operand.vmem [shape: f32[16,128], index: 5, kind: output, shape index: {}]
  %s6 = sld [smem:[#allocation0]]
  $region57: #{apply.1} parent=0
    _
  %s8 = ssub.s32 1, %s6
  %s9 = scalar_select 0, %s8, %s6
  $region1: #{apply.1} parent=0
    #allocation2 [shape = 'u8[65536]{0}', space=vmem, size = 0x10000, scoped, tag = 'input window, operand 1, single buffered']
    #allocation3 [shape = 's32[2]{0}', space=sflag, size = 0x8, scoped, tag = 'scoped memory for apply.1']
    %10 = vsyncpa [#allocation3], 0
    loop: start=0, step=1, limit=4
    $region2: #{apply.1} parent=1 // loop_pre_header
      _
    $region3: #{apply.1} parent=1 // loop_header
      %s12 = sphi 0, %s16
      %p13 = scmp.ge.s32.totalorder %s12, 4
      %s22 = sphi 0, %s24
      %s25 = sphi 0, %s22
      %s26 = sphi 0, %s25
      %s42 = sphi 0, %s26
      %s46 = sphi 0, %s46
      %s48 = sphi 0, %s46
      %s49 = sphi 0, %s48
      %s63 = sphi 0, %s49
      %s67 = sphi 0, %s67
      %s69 = sphi 0, %s67
      %s70 = sphi 0, %s69
      %s84 = sphi 0, %s70
      %s88 = sphi 0, %s88
      %s90 = sphi 0, %s88
      %s91 = sphi 0, %s90
      %s105 = sphi 0, %s91
      %s109 = sphi 0, %s109
      %s111 = sphi 0, %s109
      %s112 = sphi 0, %s111
      %s126 = sphi 0, %s112
      %s132 = sphi 0, %s134
      %s135 = sphi 0, %s132
      %s136 = sphi 0, %s135
      %s152 = sphi 0, %s136
    $region4: #{apply.1} parent=1 // loop_header_branch
      %15 = sbr.rel (%p13) target = $region8
    $region5: #{apply.1} parent=1 // loop_body
      %s17 = ssub.s32 %s12, 1
      %s18 = ssub.s32 %s12, 2
      %s19 = sadd.s32 %s12, 1
      %s20 = ssub.s32 %s12, %s19
      %p21 = scmp.eq.s32.totalorder %s20, 0
      %s23 = sadd.s32 %s22, 1
      %s24 = scalar_select %p21, %s22, %s23
      %p27 = pneg %p21
      %p28 = scmp.eq.s32.totalorder %s12, 1
      %p29 = por %p27, %p28
      %p30 = scmp.ne.s32.totalorder %s22, %s25
      %p31 = scmp.eq.s32.totalorder %s12, 0
      %p32 = por %p30, %p31
      %p33 = scmp.ne.s32.totalorder %s22, %s25
      %p34 = scmp.eq.s32.totalorder %s17, 1
      %p35 = por %p33, %p34
      %p36 = scmp.ne.s32.totalorder %s25, %s26
      %p37 = scmp.eq.s32.totalorder %s17, 0
      %p38 = por %p36, %p37
      %p39 = scmp.ne.s32.totalorder %s25, %s26
      %p40 = scmp.eq.s32.totalorder %s18, 1
      %p41 = por %p39, %p40
      %p43 = scmp.ne.s32.totalorder %s26, %s42
      %p44 = scmp.eq.s32.totalorder %s18, 0
      %p45 = por %p43, %p44
      %s47 = sadd.s32 %s46, 1
      %p50 = scmp.eq.s32.totalorder %s12, 1
      %p51 = scmp.ne.s32.totalorder %s46, %s48
      %p52 = scmp.eq.s32.totalorder %s12, 0
      %p53 = por %p51, %p52
      %p54 = scmp.ne.s32.totalorder %s46, %s48
      %p55 = scmp.eq.s32.totalorder %s17, 1
      %p56 = por %p54, %p55
      %p57 = scmp.ne.s32.totalorder %s48, %s49
      %p58 = scmp.eq.s32.totalorder %s17, 0
      %p59 = por %p57, %p58
      %p60 = scmp.ne.s32.totalorder %s48, %s49
      %p61 = scmp.eq.s32.totalorder %s18, 1
      %p62 = por %p60, %p61
      %p64 = scmp.ne.s32.totalorder %s49, %s63
      %p65 = scmp.eq.s32.totalorder %s18, 0
      %p66 = por %p64, %p65
      %s68 = sadd.s32 %s67, 1
      %p71 = scmp.eq.s32.totalorder %s12, 1
      %p72 = scmp.ne.s32.totalorder %s67, %s69
      %p73 = scmp.eq.s32.totalorder %s12, 0
      %p74 = por %p72, %p73
      %p75 = scmp.ne.s32.totalorder %s67, %s69
      %p76 = scmp.eq.s32.totalorder %s17, 1
      %p77 = por %p75, %p76
      %p78 = scmp.ne.s32.totalorder %s69, %s70
      %p79 = scmp.eq.s32.totalorder %s17, 0
      %p80 = por %p78, %p79
      %p81 = scmp.ne.s32.totalorder %s69, %s70
      %p82 = scmp.eq.s32.totalorder %s18, 1
      %p83 = por %p81, %p82
      %p85 = scmp.ne.s32.totalorder %s70, %s84
      %p86 = scmp.eq.s32.totalorder %s18, 0
      %p87 = por %p85, %p86
      %s89 = sadd.s32 %s88, 1
      %p92 = scmp.eq.s32.totalorder %s12, 1
      %p93 = scmp.ne.s32.totalorder %s88, %s90
      %p94 = scmp.eq.s32.totalorder %s12, 0
      %p95 = por %p93, %p94
      %p96 = scmp.ne.s32.totalorder %s88, %s90
      %p97 = scmp.eq.s32.totalorder %s17, 1
      %p98 = por %p96, %p97
      %p99 = scmp.ne.s32.totalorder %s90, %s91
      %p100 = scmp.eq.s32.totalorder %s17, 0
      %p101 = por %p99, %p100
      %p102 = scmp.ne.s32.totalorder %s90, %s91
      %p103 = scmp.eq.s32.totalorder %s18, 1
      %p104 = por %p102, %p103
      %p106 = scmp.ne.s32.totalorder %s91, %s105
      %p107 = scmp.eq.s32.totalorder %s18, 0
      %p108 = por %p106, %p107
      %s110 = sadd.s32 %s109, 1
      %p113 = scmp.eq.s32.totalorder %s12, 1
      %p114 = scmp.ne.s32.totalorder %s109, %s111
      %p115 = scmp.eq.s32.totalorder %s12, 0
      %p116 = por %p114, %p115
      %p117 = scmp.ne.s32.totalorder %s109, %s111
      %p118 = scmp.eq.s32.totalorder %s17, 1
      %p119 = por %p117, %p118
      %p120 = scmp.ne.s32.totalorder %s111, %s112
      %p121 = scmp.eq.s32.totalorder %s17, 0
      %p122 = por %p120, %p121
      %p123 = scmp.ne.s32.totalorder %s111, %s112
      %p124 = scmp.eq.s32.totalorder %s18, 1
      %p125 = por %p123, %p124
      %p127 = scmp.ne.s32.totalorder %s112, %s126
      %p128 = scmp.eq.s32.totalorder %s18, 0
      %p129 = por %p127, %p128
      %s130 = ssub.s32 %s12, %s19
      %p131 = scmp.eq.s32.totalorder %s130, 0
      %s133 = sadd.s32 %s132, 1
      %s134 = scalar_select %p131, %s132, %s133
      %p137 = pneg %p131
      %p138 = scmp.eq.s32.totalorder %s12, 1
      %p139 = por %p137, %p138
      %p140 = scmp.ne.s32.totalorder %s132, %s135
      %p141 = scmp.eq.s32.totalorder %s12, 0
      %p142 = por %p140, %p141
      %p143 = scmp.ne.s32.totalorder %s132, %s135
      %p144 = scmp.eq.s32.totalorder %s17, 1
      %p145 = por %p143, %p144
      %p146 = scmp.ne.s32.totalorder %s135, %s136
      %p147 = scmp.eq.s32.totalorder %s17, 0
      %p148 = por %p146, %p147
      %p149 = scmp.ne.s32.totalorder %s135, %s136
      %p150 = scmp.eq.s32.totalorder %s18, 1
      %p151 = por %p149, %p150
      %p153 = scmp.ne.s32.totalorder %s136, %s152
      %p154 = scmp.eq.s32.totalorder %s18, 0
      %p155 = por %p153, %p154
      %p156 = scmp.le.s32.totalorder 1, %s12
      %p157 = scmp.lt.s32.totalorder %s12, 3
      %p158 = pnand %p156, %p157
      %p159 = pneg %p158
      // Predicated region
      $region9: #{apply.1} parent=5 // pred_check
        _
      $region10: #{apply.1} parent=5 // pred_check_branch
        %161 = sbr.rel (%p158) target = $region12
      $region11: #{apply.1} parent=5 // pred_region
        %s162 = ssub.s32 %s12, 1
        // Predicated region
        $region13: #{apply.1} parent=11 // pred_check
          %p163 = pneg %p59
        $region14: #{apply.1} parent=11 // pred_check_branch
          %165 = sbr.rel (%p163) target = $region16
        $region15: #{apply.1} parent=11 // pred_region
          %167 = vsyncadd [#allocation3], 0
          %s168 = sshll.u32 %s1, 4
          %s169 = int_to_ptr.hbm [resolvable:$true] %s168
          %s170 = sshll.u32 [#allocation2], 4
          %s171 = int_to_ptr.vmem [resolvable:$true] %s170
          %176 = dma.hbm_to_vmem [thread:$0]  %s169, 2048, %s171, [#allocation3], 128, 128, 8
        $region16: #{apply.1} parent=11 // pred_fallthru
          _
        // Predicated region
        $region17: #{apply.1} parent=11 // pred_check
          %p177 = pneg %p80
        $region18: #{apply.1} parent=11 // pred_check_branch
          %179 = sbr.rel (%p177) target = $region20
        $region19: #{apply.1} parent=11 // pred_region
          _
        $region20: #{apply.1} parent=11 // pred_fallthru
          _
        // Predicated region
        $region21: #{apply.1} parent=11 // pred_check
          %p180 = pneg %p101
        $region22: #{apply.1} parent=11 // pred_check_branch
          %182 = sbr.rel (%p180) target = $region24
        $region23: #{apply.1} parent=11 // pred_region
          _
        $region24: #{apply.1} parent=11 // pred_fallthru
          _
        // Predicated region
        $region25: #{apply.1} parent=11 // pred_check
          %p183 = pneg %p122
        $region26: #{apply.1} parent=11 // pred_check_branch
          %185 = sbr.rel (%p183) target = $region28
        $region27: #{apply.1} parent=11 // pred_region
          _
        $region28: #{apply.1} parent=11 // pred_fallthru
          _
      $region12: #{apply.1} parent=5 // pred_fallthru
        _
      %p186 = scmp.lt.s32.totalorder %s12, 2
      // Predicated region
      $region29: #{apply.1} parent=5 // pred_check
        %p187 = pneg %p186
      $region30: #{apply.1} parent=5 // pred_check_branch
        %189 = sbr.rel (%p187) target = $region32
      $region31: #{apply.1} parent=5 // pred_region
        // Predicated region
        $region33: #{apply.1} parent=31 // pred_check
          %p190 = pneg %p32
        $region34: #{apply.1} parent=31 // pred_check_branch
          %192 = sbr.rel (%p190) target = $region36
        $region35: #{apply.1} parent=31 // pred_region
          %p193 = scmp.lt.s32.totalorder %s12, 1
          %s194 = scalar_select %p193, %s12, 1
          %s195 = smul.addr %s194, 8
          %s196 = scalar_lea.vmem %s0, %s195
        $region36: #{apply.1} parent=31 // pred_fallthru
          _
      $region32: #{apply.1} parent=5 // pred_fallthru
        _
      %p197 = scmp.le.s32.totalorder 1, %s12
      %p198 = scmp.lt.s32.totalorder %s12, 3
      %p199 = pnand %p197, %p198
      %p200 = pneg %p199
      // Predicated region
      $region37: #{apply.1} parent=5 // pred_check
        _
      $region38: #{apply.1} parent=5 // pred_check_branch
        %202 = sbr.rel (%p199) target = $region40
      $region39: #{apply.1} parent=5 // pred_region
        %s203 = ssub.s32 %s12, 1
        // Predicated region
        $region41: #{apply.1} parent=39 // pred_check
          %p204 = pneg %p59
        $region42: #{apply.1} parent=39 // pred_check_branch
          %206 = sbr.rel (%p204) target = $region44
        $region43: #{apply.1} parent=39 // pred_region
          %208 = dma.done [#allocation3], 2048
        $region44: #{apply.1} parent=39 // pred_fallthru
          _
        %p209 = scmp.lt.s32.totalorder %s17, 1
        %s210 = scalar_select %p209, %s17, 1
        %s211 = smul.addr %s210, 8
        %s212 = scalar_lea.vmem %s0, %s211
        %p213 = pneg %p38
        %p214 = pneg %p35
        %p215 = pneg %p59
        %p216 = pneg %p56
        %p217 = pneg %p80
        %p218 = pneg %p77
        %p219 = pneg %p101
        %p220 = pneg %p98
        %p221 = pneg %p122
        %p222 = pneg %p119
        %p223 = pneg %p148
        %p224 = pneg %p145
        %p225 = scmp.lt.s32.totalorder %s17, 1
        %s226 = scalar_select %p225, %s17, 1
        %s227 = smul.addr %s226, 8
        %s228 = scalar_lea.vmem %s5, %s227
        %p229 = scmp.lt.s32.totalorder %s17, 1
        %s230 = scalar_select %p229, %s17, 1
        %s231 = smul.addr %s230, 8
        %s232 = scalar_lea.vmem %s0, %s231
        %p233 = scmp.lt.s32.totalorder %s17, 1
        %s234 = scalar_select %p233, %s17, 1
        %s235 = smul.addr %s234, 8
        %s236 = scalar_lea.vmem %s5, %s235
        %v237 = vld [vmem:[%s232] sm:$0xff]
        %v238 = vld [vmem:[#allocation2] sm:$0xff]
        %v239 = vld [vmem:[#allocation2 + $0x8] sm:$0xff]
        %v240 = vld [vmem:[#allocation2 + $0x10] sm:$0xff]
        %v241 = vld [vmem:[#allocation2 + $0x18] sm:$0xff]
        %v242 = vld [vmem:[#allocation2 + $0x20] sm:$0xff]
        %v243 = vld [vmem:[#allocation2 + $0x28] sm:$0xff]
        %v244 = vld [vmem:[#allocation2 + $0x30] sm:$0xff]
        %v245 = vld [vmem:[#allocation2 + $0x38] sm:$0xff]
        %v246 = vld [vmem:[#allocation2 + $0x40] sm:$0xff]
        %v247 = vld [vmem:[#allocation2 + $0x48] sm:$0xff]
        %v248 = vld [vmem:[#allocation2 + $0x50] sm:$0xff]
        %v249 = vld [vmem:[#allocation2 + $0x58] sm:$0xff]
        %v250 = vld [vmem:[#allocation2 + $0x60] sm:$0xff]
        %v251 = vld [vmem:[#allocation2 + $0x68] sm:$0xff]
        %v252 = vld [vmem:[#allocation2 + $0x70] sm:$0xff]
        %v253 = vld [vmem:[#allocation2 + $0x78] sm:$0xff]
        %v254 = vld [vmem:[%s2] sm:$0x1]
        %v256 = vperm.slane %v254, 0
        %258 = vmatpush.msra.mxu0 %v253
        %259 = vmatpush.msra.mxu0 %v252
        %260 = vmatpush.msra.mxu0 %v251
        %261 = vmatpush.msra.mxu0 %v250
        %262 = vmatpush.msra.mxu0 %v249
        %263 = vmatpush.msra.mxu0 %v248
        %264 = vmatpush.msra.mxu0 %v247
        %265 = vmatpush.msra.mxu0 %v246
        %266 = vmatpush.msra.mxu0 %v245
        %267 = vmatpush.msra.mxu0 %v244
        %268 = vmatpush.msra.mxu0 %v243
        %269 = vmatpush.msra.mxu0 %v242
        %270 = vmatpush.msra.mxu0 %v241
        %271 = vmatpush.msra.mxu0 %v240
        %272 = vmatpush.msra.mxu0 %v239
        %273 = vmatpush.msra.mxu0 %v238
        %274 = vmatmul.f32.gmra.mxu0 %v237
        %v275 = vpop.f32.mrf.mxu0
        %v276 = vadd.f32 %v256, %v275
        %277 = vdwg.mxu0
        %v278 = vmul.f32 %v276, 0.5
        %v279 = vmul.f32 %v276, 0.70710677
        %v280 = vmul.f32 %v279, %v279
        %v281 = vmin.f32 16.0, %v280
        %v282 = vmul.f32 %v281, 2.1237322e-06
        %v283 = vadd.f32 %v282, 0.00028619796
        %v284 = vmul.f32 %v281, %v283
        %v285 = vadd.f32 %v284, 0.0036580483
        %v286 = vmul.f32 %v281, %v285
        %v287 = vadd.f32 %v286, 0.05243302
        %v288 = vmul.f32 %v281, %v287
        %v289 = vadd.f32 %v288, 0.18741608
        %v290 = vmul.f32 %v281, %v289
        %v291 = vadd.f32 %v290, 1.1283791
        %v292 = vmul.f32 %v279, %v291
        %v293 = vmul.f32 %v281, 3.8918573e-05
        %v294 = vadd.f32 %v293, 0.001143296
        %v295 = vmul.f32 %v281, %v294
        %v296 = vadd.f32 %v295, 0.014752088
        %v297 = vmul.f32 %v281, %v296
        %v298 = vadd.f32 %v297, 0.112945676
        %v299 = vmul.f32 %v281, %v298
        %v300 = vadd.f32 %v299, 0.4994258
        %v301 = vmul.f32 %v281, %v300
        %v302 = vadd.f32 %v301, 1.0
        %v303 = vrcp.pop %v302
        %v304 = vmul.f32 %v302, %v303
        %v305 = vsub.f32 1.0, %v304
        %v306 = vmul.f32 %v303, %v305
        %v307 = vadd.f32 %v303, %v306
        %vm308 = vweird.f32 %v302
        %vm309 = vweird.f32 %v303
        %vm310 = vmor %vm308, %vm309
        %v311 = vsel %vm310, %v303, %v307
        %v312 = vand.u32 2147483647, %v302
        %vm313 = vcmp.eq.f32.partialorder %v312, 8.507059e+37
        %v314 = vand.u32 %v302, 2147483648
        %v315 = vor.u32 1.1754944e-38, %v314
        %v316 = vsel %vm313, %v315, %v311
        %v317 = vmul.f32 %v292, %v316
        %v318 = vmin.f32 %v317, 1.0
        %v319 = vmax.f32 %v318, -1.0
        %v320 = vadd.f32 %v319, 1.0
        %v321 = vmul.f32 %v278, %v320
        %v322 = vlaneseq
        %v323 = vand.u32 %v322, 127
        %vm324 = vcmp.lt.s32.totalorder %v323, 32
        %v325 = vsel %vm324, 1, 0
        %vm326 = vcmp.eq.s32.totalorder %v325, 1
        %v327 = vsel %vm326, %v321, 0.0
        %328 = vadd.xlane.f32.xlu0 %v327
        %v329 = vpop.xlane.xlu0 %328
        %v330 = vmul.f32 %v329, 0.03125
        %v331 = vmul.f32 %v327, %v327
        %332 = vadd.xlane.f32.xlu0 %v331
        %v333 = vpop.xlane.xlu0 %332
        %v334 = vmul.f32 %v333, 0.03125
        %v335 = vmul.f32 %v330, %v330
        %v336 = vsub.f32 %v334, %v335
        %v337 = vmax.f32 %v336, 0.0
        %v338 = vsub.f32 %v327, %v330
        %v339 = vadd.f32 %v337, 1e-05
        %v340 = vrsqrt.pop %v339
        %v341 = vmul.f32 %v340, %v339
        %v342 = vmul.f32 %v341, %v340
        %v343 = vmul.f32 0.5, %v342
        %v344 = vsub.f32 1.5, %v343
        %v345 = vmul.f32 %v340, %v344
        %vm346 = vweird.f32 %v339
        %vm347 = vweird.f32 %v340
        %vm348 = vmor %vm346, %vm347
        %v349 = vsel %vm348, %v340, %v345
        %v350 = vmul.f32 %v338, %v349
        %v351 = vld [vmem:[%s3] sm:$0x1]
        %v353 = vperm.slane %v351, 0
        %v355 = vmul.f32 %v350, %v353
        %v356 = vld [vmem:[%s4] sm:$0x1]
        %v358 = vperm.slane %v356, 0
        %v360 = vadd.f32 %v355, %v358
        %v361 = vadd.f32 %v237, %v360
        %362 = vst [vmem:[%s236] sm:$0xff] %v361
        %p363 = scmp.lt.s32.totalorder %s17, 1
        %s364 = scalar_select %p363, %s17, 1
        %s365 = smul.addr %s364, 8
        %s366 = scalar_lea.vmem %s5, %s365
        // Predicated region
        $region45: #{apply.1} parent=39 // pred_check
          %p367 = pneg %p145
        $region46: #{apply.1} parent=39 // pred_check_branch
          %369 = sbr.rel (%p367) target = $region48
        $region47: #{apply.1} parent=39 // pred_region
          _
        $region48: #{apply.1} parent=39 // pred_fallthru
          _
      $region40: #{apply.1} parent=5 // pred_fallthru
        _
      %p370 = scmp.le.s32.totalorder 2, %s12
      // Predicated region
      $region49: #{apply.1} parent=5 // pred_check
        %p371 = pneg %p370
      $region50: #{apply.1} parent=5 // pred_check_branch
        %373 = sbr.rel (%p371) target = $region52
      $region51: #{apply.1} parent=5 // pred_region
        %s374 = ssub.s32 %s12, 2
        // Predicated region
        $region53: #{apply.1} parent=51 // pred_check
          %p375 = pneg %p151
        $region54: #{apply.1} parent=51 // pred_check_branch
          %377 = sbr.rel (%p375) target = $region56
        $region55: #{apply.1} parent=51 // pred_region
          %p378 = scmp.lt.s32.totalorder %s18, 1
          %s379 = scalar_select %p378, %s18, 1
          %s380 = smul.addr %s379, 8
          %s381 = scalar_lea.vmem %s5, %s380
        $region56: #{apply.1} parent=51 // pred_fallthru
          _
      $region52: #{apply.1} parent=5 // pred_fallthru
        _
    $region6: #{apply.1} parent=1 // loop_footer
      %s16 = sadd.s32 1, %s12
    $region7: #{apply.1} parent=1 // loop_footer_branch
      %11 = sbr.rel target = $region3
    $region8: #{apply.1} parent=1 // loop_exit
      _
    %382 = vsyncpa [#allocation3], 1
    %s383 = scalar_lea.sflag [#allocation3], 1
    %384 = vsyncpa %s383, 1

</llo_original>
